<compile_context>
chip_gen: v7x
topology: tpu7x:2x2x1
jax: 0.10.0
libtpu: 0.0.40
codegen_flags: <defaults>
</compile_context>

<pallas_src>
import functools

import jax
import jax.numpy as jnp
from jax.experimental import pallas as pl
from jax.experimental.pallas import tpu as pltpu


def _round_up(x, m):
    return (x + m - 1) // m * m


def _dilated_circ_conv_kernel(x_ref, w_ref, b_ref, o_ref, cols_ref, *,
                              k_taps, dilation):
    # x_ref   : (C_in, L_in)      flattened, circularly padded input slab
    # w_ref   : (C_out, K*C_in)   weights, tap-major / channel-minor rows
    # b_ref   : (C_out, 1)        bias
    # o_ref   : (C_out, L_out)    lane-dense output slab (L_out % 128 == 0)
    # cols_ref: (K*C_in, L_out)   VMEM scratch: im2col operand
    c_in = x_ref.shape[0]
    l_out = o_ref.shape[-1]

    # im2col: tap k of every output column is the input slab shifted by
    # k*dilation lanes.  Slice the Ref (cheap offset load from VMEM) and park
    # each tap in its row band of the scratch, so all K taps fuse below.
    for k in range(k_taps):
        cols_ref[pl.ds(k * c_in, c_in), :] = x_ref[:, pl.ds(k * dilation, l_out)]

    # Single fused MXU matmul with f32 accumulation: contraction depth K*C_in
    # instead of C_in (=> ~K x better MXU utilization, one result-FIFO pass).
    acc = jnp.dot(w_ref[...], cols_ref[...], preferred_element_type=jnp.float32)
    acc = acc + b_ref[...].astype(jnp.float32)
    o_ref[...] = acc.astype(o_ref.dtype)


def _step_vmem_bytes(b_tile, c_in, c_out, k_taps, w_pad, pad, itemsize):
    l_out = _round_up(b_tile * w_pad, 128)
    l_in = l_out + 2 * pad
    return (2 * c_in * l_in            # double-buffered input block
            + 2 * c_out * l_out        # double-buffered output block
            + k_taps * c_in * l_out    # im2col scratch (single-buffered)
            + c_out * k_taps * c_in    # resident weights
            + c_out) * itemsize


def _choose_b_tile(b, c_in, c_out, k_taps, w_pad, pad, itemsize,
                   vmem_budget=8 << 20, target_lanes=1024):
    """Batch elements per grid step: aim for >= target_lanes flattened lanes,
    but stay inside a VMEM budget sized conservatively for v7x (64 MiB)."""
    bt = max(1, min(b, -(-target_lanes // w_pad)))
    while bt > 1 and _step_vmem_bytes(bt, c_in, c_out, k_taps, w_pad, pad,
                                      itemsize) > vmem_budget:
        bt -= 1
    return bt


def dilated_circ_conv(x, weight, bias, *, n_adj=4, dilation=1, b_tile=None):
    """x: (B, C_in, N); weight: (C_out, C_in, 2*n_adj+1); bias: (C_out,)."""
    b, c_in, n = x.shape
    c_out, c_in_w, k_taps = weight.shape
    assert c_in_w == c_in and k_taps == 2 * n_adj + 1

    pad = n_adj * dilation
    if pad > n:
        raise ValueError(f"n_adj*dilation={pad} must be <= N={n} "
                         "(PyTorch's cat-based circular pad clamps here).")

    w_pad = n + 2 * pad                       # per-window padded length
    itemsize = jnp.dtype(x.dtype).itemsize

    if b_tile is None:
        b_tile = _choose_b_tile(b, c_in, c_out, k_taps, w_pad, pad, itemsize)
    b_tile = max(1, min(b_tile, b))
    num_tiles = -(-b // b_tile)
    b_padded = num_tiles * b_tile

    l_valid = b_tile * w_pad                  # real columns per tile
    l_out = _round_up(l_valid, 128)           # lane-dense output block width
    l_in = l_out + 2 * pad                    # input slab width per tile

    # ---- wrapper-side layout plumbing (one fused copy pass under jit) ----
    xb = x if b_padded == b else jnp.pad(x, ((0, b_padded - b), (0, 0), (0, 0)))
    if pad > 0:
        xc = jnp.concatenate([xb[..., -pad:], xb, xb[..., :pad]], axis=-1)
    else:
        xc = xb                                           # (B_pad, C_in, W_pad)
    slab = (xc.reshape(num_tiles, b_tile, c_in, w_pad)
              .transpose(0, 2, 1, 3)
              .reshape(num_tiles, c_in, l_valid))
    if l_in > l_valid:
        slab = jnp.pad(slab, ((0, 0), (0, 0), (0, l_in - l_valid)))

    # Weights: (C_out, C_in, K) -> (C_out, K*C_in), tap-major / channel-minor,
    # matching the im2col row order; bias as a (C_out, 1) column.
    w2 = jnp.transpose(weight, (0, 2, 1)).reshape(c_out, k_taps * c_in)
    bias2d = bias.reshape(c_out, 1)

    kernel = functools.partial(_dilated_circ_conv_kernel,
                               k_taps=k_taps, dilation=dilation)

    step_bytes = _step_vmem_bytes(b_tile, c_in, c_out, k_taps, w_pad, pad,
                                  itemsize)
    vmem_limit = min(max(2 * step_bytes, 4 << 20), 64 << 20)

    y = pl.pallas_call(
        kernel,
        out_shape=jax.ShapeDtypeStruct((num_tiles, c_out, l_out), x.dtype),
        grid_spec=pltpu.PrefetchScalarGridSpec(
            num_scalar_prefetch=0,
            grid=(num_tiles,),
            in_specs=[
                pl.BlockSpec((None, c_in, l_in), lambda t: (t, 0, 0)),
                pl.BlockSpec((c_out, k_taps * c_in), lambda t: (0, 0)),
                pl.BlockSpec((c_out, 1), lambda t: (0, 0)),
            ],
            out_specs=pl.BlockSpec((None, c_out, l_out), lambda t: (t, 0, 0)),
            scratch_shapes=[pltpu.VMEM((k_taps * c_in, l_out), x.dtype)],
        ),
        compiler_params=pltpu.CompilerParams(
            dimension_semantics=("parallel",),
            vmem_limit_bytes=vmem_limit),
    )(slab, w2, bias2d)

    # Un-flatten: drop lane padding, split windows, drop per-window pad tails
    # and batch padding.
    y = y[..., :l_valid]
    y = y.reshape(num_tiles, c_out, b_tile, w_pad).transpose(0, 2, 1, 3)
    y = y.reshape(b_padded, c_out, w_pad)[:b, :, :n]
    return y


if __name__ == "__main__":
    key = jax.random.PRNGKey(0)
    k1, k2, k3 = jax.random.split(key, 3)

    # Small shapes consistent with the module: contour of N=16 points,
    # state_dim=4 channels, batch of 2 contours.
    B, C_in, N = 2, 4, 16
    C_out = 4
    n_adj, dilation = 4, 1
    K = 2 * n_adj + 1

    x = jax.random.normal(k1, (B, C_in, N), dtype=jnp.float32)

    # Deterministic Conv1d-style init (uniform in +/- 1/sqrt(fan_in)).
    fan_in = C_in * K
    bound = 1.0 / (fan_in ** 0.5)
    weight = jax.random.uniform(k2, (C_out, C_in, K), jnp.float32, -bound, bound)
    bias = jax.random.uniform(k3, (C_out,), jnp.float32, -bound, bound)

    conv = jax.jit(functools.partial(dilated_circ_conv, n_adj=n_adj,
                                     dilation=dilation))
    out = jax.block_until_ready(conv(x, weight, bias))

    # Pure-JAX reference (same circular pad + VALID dilated conv).
    pad = n_adj * dilation
    xp_ref = jnp.concatenate([x[..., -pad:], x, x[..., :pad]], axis=2)
    ref = jax.lax.conv_general_dilated(
        xp_ref, weight, window_strides=(1,), padding="VALID",
        rhs_dilation=(dilation,),
        dimension_numbers=("NCH", "OIH", "NCH")) + bias[None, :, None]

    assert out.shape == (B, C_out, N)
    assert jnp.allclose(out, ref, atol=1e-5, rtol=1e-5)
    print("KERNEL_OK")
</pallas_src>

<mosaic_0001>
module attributes {stable_mosaic.version = 11 : i64} {
  func.func @_dilated_circ_conv_kernel(%arg0: i32, %arg1: memref<1x4x136xf32, #tpu.memory_space<vmem>>, %arg2: memref<4x36xf32, #tpu.memory_space<vmem>>, %arg3: memref<4x1xf32, #tpu.memory_space<vmem>>, %arg4: memref<1x4x128xf32, #tpu.memory_space<vmem>>, %arg5: memref<36x128xf32, #tpu.memory_space<vmem>>) attributes {dimension_semantics = [#tpu.dimension_semantics<parallel>], iteration_bounds = array<i64: 1>, scalar_prefetch = 0 : i64, scratch_operands = 1 : i64, tpu.core_type = #tpu.core_type<tc>, window_params = [{transform_indices = @transform_0, window_bounds = array<i64: 1, 4, 136>}, {pipeline_mode = #tpu.pipeline_mode<synchronous>, transform_indices = @transform_1, window_bounds = array<i64: 4, 36>}, {pipeline_mode = #tpu.pipeline_mode<synchronous>, transform_indices = @transform_2, window_bounds = array<i64: 4, 1>}, {transform_indices = @transform_3, window_bounds = array<i64: 1, 4, 128>}]} {
    %c0 = arith.constant 0 : index
    %c0_0 = arith.constant 0 : index
    %c0_1 = arith.constant 0 : index
    %0 = vector.load %arg1[%c0, %c0_0, %c0_1] : memref<1x4x136xf32, #tpu.memory_space<vmem>>, vector<1x4x128xf32>
    %1 = vector.shape_cast %0 : vector<1x4x128xf32> to vector<4x128xf32>
    %c0_2 = arith.constant 0 : index
    %c0_3 = arith.constant 0 : index
    %2 = vector.load %arg5[%c0_2, %c0_3] : memref<36x128xf32, #tpu.memory_space<vmem>>, vector<4x128xf32>
    tpu.vector_store %arg5[%c0_2, %c0_3], %1 {strides = array<i32>} : memref<36x128xf32, #tpu.memory_space<vmem>>, vector<4x128xf32>,
    %c0_4 = arith.constant 0 : index
    %c0_5 = arith.constant 0 : index
    %c1 = arith.constant 1 : index
    %3 = vector.load %arg1[%c0_4, %c0_5, %c1] : memref<1x4x136xf32, #tpu.memory_space<vmem>>, vector<1x4x128xf32>
    %4 = vector.shape_cast %3 : vector<1x4x128xf32> to vector<4x128xf32>
    %c4 = arith.constant 4 : index
    %c0_6 = arith.constant 0 : index
    %5 = vector.load %arg5[%c4, %c0_6] : memref<36x128xf32, #tpu.memory_space<vmem>>, vector<4x128xf32>
    tpu.vector_store %arg5[%c4, %c0_6], %4 {strides = array<i32>} : memref<36x128xf32, #tpu.memory_space<vmem>>, vector<4x128xf32>,
    %c0_7 = arith.constant 0 : index
    %c0_8 = arith.constant 0 : index
    %c2 = arith.constant 2 : index
    %6 = vector.load %arg1[%c0_7, %c0_8, %c2] : memref<1x4x136xf32, #tpu.memory_space<vmem>>, vector<1x4x128xf32>
    %7 = vector.shape_cast %6 : vector<1x4x128xf32> to vector<4x128xf32>
    %c8 = arith.constant 8 : index
    %c0_9 = arith.constant 0 : index
    %8 = vector.load %arg5[%c8, %c0_9] : memref<36x128xf32, #tpu.memory_space<vmem>>, vector<4x128xf32>
    tpu.vector_store %arg5[%c8, %c0_9], %7 {strides = array<i32>} : memref<36x128xf32, #tpu.memory_space<vmem>>, vector<4x128xf32>,
    %c0_10 = arith.constant 0 : index
    %c0_11 = arith.constant 0 : index
    %c3 = arith.constant 3 : index
    %9 = vector.load %arg1[%c0_10, %c0_11, %c3] : memref<1x4x136xf32, #tpu.memory_space<vmem>>, vector<1x4x128xf32>
    %10 = vector.shape_cast %9 : vector<1x4x128xf32> to vector<4x128xf32>
    %c12 = arith.constant 12 : index
    %c0_12 = arith.constant 0 : index
    %11 = vector.load %arg5[%c12, %c0_12] : memref<36x128xf32, #tpu.memory_space<vmem>>, vector<4x128xf32>
    tpu.vector_store %arg5[%c12, %c0_12], %10 {strides = array<i32>} : memref<36x128xf32, #tpu.memory_space<vmem>>, vector<4x128xf32>,
    %c0_13 = arith.constant 0 : index
    %c0_14 = arith.constant 0 : index
    %c4_15 = arith.constant 4 : index
    %12 = vector.load %arg1[%c0_13, %c0_14, %c4_15] : memref<1x4x136xf32, #tpu.memory_space<vmem>>, vector<1x4x128xf32>
    %13 = vector.shape_cast %12 : vector<1x4x128xf32> to vector<4x128xf32>
    %c16 = arith.constant 16 : index
    %c0_16 = arith.constant 0 : index
    %14 = vector.load %arg5[%c16, %c0_16] : memref<36x128xf32, #tpu.memory_space<vmem>>, vector<4x128xf32>
    tpu.vector_store %arg5[%c16, %c0_16], %13 {strides = array<i32>} : memref<36x128xf32, #tpu.memory_space<vmem>>, vector<4x128xf32>,
    %c0_17 = arith.constant 0 : index
    %c0_18 = arith.constant 0 : index
    %c5 = arith.constant 5 : index
    %15 = vector.load %arg1[%c0_17, %c0_18, %c5] : memref<1x4x136xf32, #tpu.memory_space<vmem>>, vector<1x4x128xf32>
    %16 = vector.shape_cast %15 : vector<1x4x128xf32> to vector<4x128xf32>
    %c20 = arith.constant 20 : index
    %c0_19 = arith.constant 0 : index
    %17 = vector.load %arg5[%c20, %c0_19] : memref<36x128xf32, #tpu.memory_space<vmem>>, vector<4x128xf32>
    tpu.vector_store %arg5[%c20, %c0_19], %16 {strides = array<i32>} : memref<36x128xf32, #tpu.memory_space<vmem>>, vector<4x128xf32>,
    %c0_20 = arith.constant 0 : index
    %c0_21 = arith.constant 0 : index
    %c6 = arith.constant 6 : index
    %18 = vector.load %arg1[%c0_20, %c0_21, %c6] : memref<1x4x136xf32, #tpu.memory_space<vmem>>, vector<1x4x128xf32>
    %19 = vector.shape_cast %18 : vector<1x4x128xf32> to vector<4x128xf32>
    %c24 = arith.constant 24 : index
    %c0_22 = arith.constant 0 : index
    %20 = vector.load %arg5[%c24, %c0_22] : memref<36x128xf32, #tpu.memory_space<vmem>>, vector<4x128xf32>
    tpu.vector_store %arg5[%c24, %c0_22], %19 {strides = array<i32>} : memref<36x128xf32, #tpu.memory_space<vmem>>, vector<4x128xf32>,
    %c0_23 = arith.constant 0 : index
    %c0_24 = arith.constant 0 : index
    %c7 = arith.constant 7 : index
    %21 = vector.load %arg1[%c0_23, %c0_24, %c7] : memref<1x4x136xf32, #tpu.memory_space<vmem>>, vector<1x4x128xf32>
    %22 = vector.shape_cast %21 : vector<1x4x128xf32> to vector<4x128xf32>
    %c28 = arith.constant 28 : index
    %c0_25 = arith.constant 0 : index
    %23 = vector.load %arg5[%c28, %c0_25] : memref<36x128xf32, #tpu.memory_space<vmem>>, vector<4x128xf32>
    tpu.vector_store %arg5[%c28, %c0_25], %22 {strides = array<i32>} : memref<36x128xf32, #tpu.memory_space<vmem>>, vector<4x128xf32>,
    %c0_26 = arith.constant 0 : index
    %c0_27 = arith.constant 0 : index
    %c8_28 = arith.constant 8 : index
    %24 = vector.load %arg1[%c0_26, %c0_27, %c8_28] : memref<1x4x136xf32, #tpu.memory_space<vmem>>, vector<1x4x128xf32>
    %25 = vector.shape_cast %24 : vector<1x4x128xf32> to vector<4x128xf32>
    %c32 = arith.constant 32 : index
    %c0_29 = arith.constant 0 : index
    %26 = vector.load %arg5[%c32, %c0_29] : memref<36x128xf32, #tpu.memory_space<vmem>>, vector<4x128xf32>
    tpu.vector_store %arg5[%c32, %c0_29], %25 {strides = array<i32>} : memref<36x128xf32, #tpu.memory_space<vmem>>, vector<4x128xf32>,
    %c0_30 = arith.constant 0 : index
    %c0_31 = arith.constant 0 : index
    %27 = vector.load %arg2[%c0_30, %c0_31] : memref<4x36xf32, #tpu.memory_space<vmem>>, vector<4x36xf32>
    %c0_32 = arith.constant 0 : index
    %c0_33 = arith.constant 0 : index
    %28 = vector.load %arg5[%c0_32, %c0_33] : memref<36x128xf32, #tpu.memory_space<vmem>>, vector<36x128xf32>
    %cst = arith.constant dense<0.000000e+00> : vector<4x128xf32>
    %29 = tpu.matmul %27, %28, %cst {dimension_numbers = #tpu.dot_dimension_numbers<[1], [0], [0], [1], [0, 0, 1, 1], [], []>} : vector<4x36xf32>, vector<36x128xf32>, vector<4x128xf32> -> vector<4x128xf32>
    %c0_34 = arith.constant 0 : index
    %c0_35 = arith.constant 0 : index
    %30 = vector.load %arg3[%c0_34, %c0_35] : memref<4x1xf32, #tpu.memory_space<vmem>>, vector<4x1xf32>
    %31 = vector.broadcast %30 : vector<4x1xf32> to vector<4x128xf32>
    %32 = arith.addf %29, %31 : vector<4x128xf32>
    %c0_36 = arith.constant 0 : index
    %c0_37 = arith.constant 0 : index
    %c0_38 = arith.constant 0 : index
    %33 = vector.load %arg4[%c0_36, %c0_37, %c0_38] : memref<1x4x128xf32, #tpu.memory_space<vmem>>, vector<1x4x128xf32>
    %34 = vector.shape_cast %33 : vector<1x4x128xf32> to vector<4x128xf32>
    %35 = vector.shape_cast %32 : vector<4x128xf32> to vector<1x4x128xf32>
    tpu.vector_store %arg4[%c0_36, %c0_37, %c0_38], %35 {strides = array<i32>} : memref<1x4x128xf32, #tpu.memory_space<vmem>>, vector<1x4x128xf32>,
    return
  }
  func.func @transform_0(%arg0: i32) -> (i32, i32, i32) {
    %c0_i32 = arith.constant 0 : i32
    %c0_i32_0 = arith.constant 0 : i32
    %c0_i32_1 = arith.constant 0 : i32
    return %arg0, %c0_i32, %c0_i32_0 : i32, i32, i32
  }
  func.func @transform_1(%arg0: i32) -> (i32, i32) {
    %c0_i32 = arith.constant 0 : i32
    %c0_i32_0 = arith.constant 0 : i32
    %c0_i32_1 = arith.constant 0 : i32
    return %c0_i32, %c0_i32_0 : i32, i32
  }
  func.func @transform_2(%arg0: i32) -> (i32, i32) {
    %c0_i32 = arith.constant 0 : i32
    %c0_i32_0 = arith.constant 0 : i32
    %c0_i32_1 = arith.constant 0 : i32
    return %c0_i32, %c0_i32_0 : i32, i32
  }
  func.func @transform_3(%arg0: i32) -> (i32, i32, i32) {
    %c0_i32 = arith.constant 0 : i32
    %c0_i32_0 = arith.constant 0 : i32
    %c0_i32_1 = arith.constant 0 : i32
    return %arg0, %c0_i32, %c0_i32_0 : i32, i32, i32
  }
}

</mosaic_0001>

<llo_original>
// kernel: dilated_circ_conv.1
$region0: #{dilated_circ_conv.1}
  #allocation0 [shape = 'u32[]', space=smem, size = 0x4, offset = 0x4, fixed_abs, tag = 'smem constant byte address 0x4 - core index']
  #allocation1 [shape = 'u32[144,128]{1,0:T(1,128)}', space=vmem, size = 0x12000, scoped, tag = 'internal scratch']
  #allocation2 [shape = 'f32[36,128]{1,0:T(8,128)}', space=vmem, size = 0x5000, scoped, tag = 'scratch operand']
  %s0 = inlined_call_operand.vmem [shape: f32[1,4,136], index: 0, kind: input, shape index: {}]
  %s1 = inlined_call_operand.vmem [shape: f32[4,36], index: 1, kind: input, shape index: {}]
  %s2 = inlined_call_operand.vmem [shape: f32[4,1], index: 2, kind: input, shape index: {}]
  %s3 = inlined_call_operand.vmem [shape: f32[1,4,128], index: 3, kind: output, shape index: {}]
  %s4 = sld [smem:[#allocation0]]
  $region22: #{dilated_circ_conv.1} parent=0
    _
  %s6 = ssub.s32 1, %s4
  %s7 = scalar_select 0, %s6, %s4
  // Predicated region
  $region2: #{dilated_circ_conv.1} parent=0 // pred_check
    _
  $region3: #{dilated_circ_conv.1} parent=0 // pred_check_branch
    %9 = sbr.rel (0) target = $region5
  $region4: #{dilated_circ_conv.1} parent=0 // pred_region
    _
  $region5: #{dilated_circ_conv.1} parent=0 // pred_fallthru
    _
  // Predicated region
  $region6: #{dilated_circ_conv.1} parent=0 // pred_check
    _
  $region7: #{dilated_circ_conv.1} parent=0 // pred_check_branch
    %11 = sbr.rel (0) target = $region9
  $region8: #{dilated_circ_conv.1} parent=0 // pred_region
    _
  $region9: #{dilated_circ_conv.1} parent=0 // pred_fallthru
    _
  // Predicated region
  $region10: #{dilated_circ_conv.1} parent=0 // pred_check
    _
  $region11: #{dilated_circ_conv.1} parent=0 // pred_check_branch
    %13 = sbr.rel (0) target = $region13
  $region12: #{dilated_circ_conv.1} parent=0 // pred_region
    _
  $region13: #{dilated_circ_conv.1} parent=0 // pred_fallthru
    _
  %v14 = vld [vmem:[%s0] sm:$0xf]
  %15 = vst [vmem:[#allocation2] sm:$0xf] %v14
  %v16 = vld [vmem:[%s0] sm:$0xff]
  %v18 = vcombine.high %v16, %v16
  %19 = vrot.lane.b32.xlu0 %v16, 127
  %v20 = vpop.permute.xlu0 %19
  %21 = vrot.lane.b32.xlu0 %v18, 127
  %v22 = vpop.permute.xlu0 %21
  %vm23 = vcmask 1039360
  %v24 = vsel %vm23, %v20, %v22
  %26 = vst [vmem:[#allocation2 + $0x4] sm:$0xf] %v24
  %v27 = vld [vmem:[%s0] sm:$0xff]
  %v29 = vcombine.high %v27, %v27
  %30 = vrot.lane.b32.xlu0 %v27, 126
  %v31 = vpop.permute.xlu0 %30
  %32 = vrot.lane.b32.xlu0 %v29, 126
  %v33 = vpop.permute.xlu0 %32
  %vm34 = vcmask 1031168
  %v35 = vsel %vm34, %v31, %v33
  %37 = vst [vmem:[#allocation2 + $0x8] sm:$0xf] %v35
  %v38 = vld [vmem:[%s0] sm:$0xff]
  %v40 = vcombine.high %v38, %v38
  %41 = vrot.lane.b32.xlu0 %v38, 125
  %v42 = vpop.permute.xlu0 %41
  %43 = vrot.lane.b32.xlu0 %v40, 125
  %v44 = vpop.permute.xlu0 %43
  %vm45 = vcmask 1022976
  %v46 = vsel %vm45, %v42, %v44
  %48 = vst [vmem:[#allocation2 + $0xc] sm:$0xf] %v46
  %v49 = vld [vmem:[%s0] sm:$0xff]
  %v51 = vcombine.high %v49, %v49
  %52 = vrot.lane.b32.xlu0 %v49, 124
  %v53 = vpop.permute.xlu0 %52
  %54 = vrot.lane.b32.xlu0 %v51, 124
  %v55 = vpop.permute.xlu0 %54
  %vm56 = vcmask 1014784
  %v57 = vsel %vm56, %v53, %v55
  %59 = vst [vmem:[#allocation2 + $0x10] sm:$0xf] %v57
  %v60 = vld [vmem:[%s0] sm:$0xff]
  %v62 = vcombine.high %v60, %v60
  %63 = vrot.lane.b32.xlu0 %v60, 123
  %v64 = vpop.permute.xlu0 %63
  %65 = vrot.lane.b32.xlu0 %v62, 123
  %v66 = vpop.permute.xlu0 %65
  %vm67 = vcmask 1006592
  %v68 = vsel %vm67, %v64, %v66
  %70 = vst [vmem:[#allocation2 + $0x14] sm:$0xf] %v68
  %v71 = vld [vmem:[%s0] sm:$0xff]
  %v73 = vcombine.high %v71, %v71
  %74 = vrot.lane.b32.xlu0 %v71, 122
  %v75 = vpop.permute.xlu0 %74
  %76 = vrot.lane.b32.xlu0 %v73, 122
  %v77 = vpop.permute.xlu0 %76
  %vm78 = vcmask 998400
  %v79 = vsel %vm78, %v75, %v77
  %81 = vst [vmem:[#allocation2 + $0x18] sm:$0xf] %v79
  %v82 = vld [vmem:[%s0] sm:$0xff]
  %v84 = vcombine.high %v82, %v82
  %85 = vrot.lane.b32.xlu0 %v82, 121
  %v86 = vpop.permute.xlu0 %85
  %87 = vrot.lane.b32.xlu0 %v84, 121
  %v88 = vpop.permute.xlu0 %87
  %vm89 = vcmask 990208
  %v90 = vsel %vm89, %v86, %v88
  %92 = vst [vmem:[#allocation2 + $0x1c] sm:$0xf] %v90
  %v93 = vld [vmem:[%s0] sm:$0xff]
  %v95 = vcombine.high %v93, %v93
  %96 = vrot.lane.b32.xlu0 %v93, 120
  %v97 = vpop.permute.xlu0 %96
  %98 = vrot.lane.b32.xlu0 %v95, 120
  %v99 = vpop.permute.xlu0 %98
  %vm100 = vcmask 982016
  %v101 = vsel %vm100, %v97, %v99
  %103 = vst [vmem:[#allocation2 + $0x20] sm:$0xf] %v101
  %v104 = vld [vmem:[%s1] sm:$0xf]
  %v105 = vld [vmem:[#allocation2] sm:$0xff]
  %v106 = vld [vmem:[#allocation2 + $0x8] sm:$0xff]
  %v107 = vld [vmem:[#allocation2 + $0x10] sm:$0xff]
  %v108 = vld [vmem:[#allocation2 + $0x18] sm:$0xff]
  %v109 = vld [vmem:[#allocation2 + $0x20] sm:$0xf]
  %v110 = vld [vmem:[%s2] sm:$0xf]
  %112 = vset.pattern.permute.xlu0 0
  %113 = vperm.xlu0 %112, %v110
  %v114 = vpop.permute.xlu0 %113
  %vm116 = vcmask 293888
  %v118 = vsel %vm116, %v104, 0
  %vm120 = vcmask 1043456
  %v122 = vsel %vm120, %v109, 0
  %124 = vmatprep.subr.mxu0 0.0
  %125 = vmatpush1.msra.mxu0 %v105
  %126 = vmatprep.subr.mxu0 0.0
  %127 = vmatpush1.msra.mxu0 %v106
  %128 = vmatprep.subr.mxu0 0.0
  %129 = vmatpush1.msra.mxu0 %v107
  %130 = vmatprep.subr.mxu0 0.0
  %131 = vmatpush1.msra.mxu0 %v108
  %132 = vmatprep.subr.mxu0 0.0
  %133 = vmatpush1.msra.mxu0 %v122
  %134 = vmatprep.subr.mxu0 0.0
  %135 = vmatpush1.msra.mxu0 0.0
  %136 = vmatprep.subr.mxu0 0.0
  %137 = vmatpush1.msra.mxu0 0.0
  %138 = vmatprep.subr.mxu0 0.0
  %139 = vmatpush1.msra.mxu0 0.0
  %140 = vmatprep.subr.mxu0 0.0
  %141 = vmatpush1.msra.mxu0 0.0
  %142 = vmatprep.subr.mxu0 0.0
  %143 = vmatpush1.msra.mxu0 0.0
  %144 = vmatprep.subr.mxu0 0.0
  %145 = vmatpush1.msra.mxu0 0.0
  %146 = vmatprep.subr.mxu0 0.0
  %147 = vmatpush1.msra.mxu0 0.0
  %148 = vmatprep.subr.mxu0 0.0
  %149 = vmatpush1.msra.mxu0 0.0
  %150 = vmatprep.subr.mxu0 0.0
  %151 = vmatpush1.msra.mxu0 0.0
  %152 = vmatprep.subr.mxu0 0.0
  %153 = vmatpush1.msra.mxu0 0.0
  %154 = vmatprep.subr.mxu0 0.0
  %155 = vmatpush1.msra.mxu0 0.0
  %156 = vmatprep.subr.mxu0 0.0
  %157 = vmatpush1.msra.mxu0 0.0
  %158 = vmatprep.subr.mxu0 0.0
  %159 = vmatpush1.msra.mxu0 0.0
  %160 = vmatprep.subr.mxu0 0.0
  %161 = vmatpush1.msra.mxu0 0.0
  %162 = vmatprep.subr.mxu0 0.0
  %163 = vmatpush1.msra.mxu0 0.0
  %164 = vmatprep.subr.mxu0 0.0
  %165 = vmatpush1.msra.mxu0 0.0
  %166 = vmatprep.subr.mxu0 0.0
  %167 = vmatpush1.msra.mxu0 0.0
  %168 = vmatprep.subr.mxu0 0.0
  %169 = vmatpush1.msra.mxu0 0.0
  %170 = vmatprep.subr.mxu0 0.0
  %171 = vmatpush1.msra.mxu0 0.0
  %172 = vmatprep.subr.mxu0 0.0
  %173 = vmatpush1.msra.mxu0 0.0
  %174 = vmatprep.subr.mxu0 0.0
  %175 = vmatpush1.msra.mxu0 0.0
  %176 = vmatprep.subr.mxu0 0.0
  %177 = vmatpush1.msra.mxu0 0.0
  %178 = vmatprep.subr.mxu0 0.0
  %179 = vmatpush1.msra.mxu0 0.0
  %180 = vmatprep.subr.mxu0 0.0
  %181 = vmatpush1.msra.mxu0 0.0
  %182 = vmatprep.subr.mxu0 0.0
  %183 = vmatpush1.msra.mxu0 0.0
  %184 = vmatprep.subr.mxu0 0.0
  %185 = vmatpush1.msra.mxu0 0.0
  %186 = vmatprep.subr.mxu0 0.0
  %187 = vmatpush1.msra.mxu0 0.0
  %188 = vmatprep.mubr.f32.mxu0 0.0
  %189 = vmatmul.mubr.f32.gmra.mrb[0].mxu0 %v118
  %v190 = vpop.f32.mrb[0].mxu0
  %v191 = vadd.f32 %v114, %v190
  %v192 = vpop.f32.mrb[0].mxu0
  %193 = vdwg.mxu0
  %194 = vst [vmem:[%s3] sm:$0xf] %v191
  // Predicated region
  $region14: #{dilated_circ_conv.1} parent=0 // pred_check
    _
  $region15: #{dilated_circ_conv.1} parent=0 // pred_check_branch
    %196 = sbr.rel (0) target = $region17
  $region16: #{dilated_circ_conv.1} parent=0 // pred_region
    _
  $region17: #{dilated_circ_conv.1} parent=0 // pred_fallthru
    _
  // Predicated region
  $region18: #{dilated_circ_conv.1} parent=0 // pred_check
    _
  $region19: #{dilated_circ_conv.1} parent=0 // pred_check_branch
    %198 = sbr.rel (0) target = $region21
  $region20: #{dilated_circ_conv.1} parent=0 // pred_region
    _
  $region21: #{dilated_circ_conv.1} parent=0 // pred_fallthru
    _

</llo_original>
